<compile_context>
chip_gen: v7x
topology: tpu7x:2x2x1
jax: 0.10.0
libtpu: 0.0.40
codegen_flags: <defaults>
</compile_context>

<pallas_src>
import jax
import jax.numpy as jnp
from jax.experimental import pallas as pl
from jax.experimental.pallas import tpu as pltpu


def _rows_per_chunk(total_rows, max_rows=1024):
    """Largest divisor of total_rows that is a multiple of 8 and <= max_rows."""
    if total_rows <= max_rows:
        return total_rows
    best = 8
    d = 8
    while d <= max_rows:
        if total_rows % d == 0:
            best = d
        d += 8
    return best


def tml_loss_forward(model_output, input_modalities, lengths,
                     corr_lambda=0.5, modalities_lambda=2.0):
    _features, predicted_modalities, hidden_states_modalities = model_output
    pred0, pred1 = predicted_modalities
    inp0, inp1 = input_modalities
    h0 = hidden_states_modalities[0][0]   # [1, B, Hd]  (LSTM h_n, single layer)
    h1 = hidden_states_modalities[1][0]   # [1, B, Hd]

    B, T, D0 = pred0.shape
    _, _, C, H, W = pred1.shape
    Hd = h0.shape[-1]
    HW = H * W
    CHW = C * HW

    # Frame index per example. Clamped so lengths==0 never yields a negative index
    # (no runtime OOB checks on TPU refs).
    idx = jnp.maximum(lengths.astype(jnp.int32) - 1, 0)          # [B] -> SMEM (scalar prefetch)

    # ---- tiny tensors: gather in the wrapper (negligible bytes), whole-block inputs.
    bidx = jnp.arange(B)
    p0g = pred0[bidx, idx]                                       # [B, D0]
    x0g = inp0[bidx, idx]                                        # [B, D0]
    h0f = h0.reshape(B, Hd)
    h1f = h1.reshape(B, Hd)

    # ---- image tensors: pred1 is read directly from HBM by the kernel (free reshape only).
    dense = (CHW % 128 == 0)
    if dense:
        R = CHW // 128
        if R % 8 == 0:
            rc = _rows_per_chunk(R)        # multiple-of-8 divisor of R, <= 1024 rows
            vpu_only = True
        else:
            rc = R
            vpu_only = False
        NR = R // rc
        p1v = pred1.reshape(B, T, R, 128)                        # free metadata reshape
        # TODO(synk): gather+permute of the B selected inp1 frames is the one remaining
        # wrapper materialization (HWC->CHW has no cheap, safe in-kernel equivalent).
        x1t = jnp.transpose(inp1[bidx, idx], (0, 3, 1, 2)).reshape(B, R, 128)
        p1_spec = pl.BlockSpec((None, None, rc, 128),
                               lambda b, r, i: (b, i[b], r, 0))
        x1_spec = pl.BlockSpec((None, rc, 128), lambda b, r, i: (b, r, 0))
    else:
        NR = 1
        vpu_only = False
        p1v = pred1.reshape(B, T, C, HW)
        x1t = jnp.transpose(inp1[bidx, idx], (0, 3, 1, 2)).reshape(B, C, HW)
        p1_spec = pl.BlockSpec((None, None, C, HW),
                               lambda b, r, i: (b, i[b], 0, 0))
        x1_spec = pl.BlockSpec((None, C, HW), lambda b, r, i: (b, 0, 0))

    center = B > 1                      # static batch_size > 1 branch of corr_loss
    EPS = 1e-7
    inv_d0 = 1.0 / D0
    img_w = modalities_lambda / CHW     # per-element weight for the image modality
    inv_terms = 1.0 / (2.0 * B)         # "i" counter in the PyTorch loop = 2 modalities * B

    def kernel(idx_ref, p1_ref, x1_ref, p0_ref, x0_ref, h0_ref, h1_ref,
               out_ref, acc_ref):
        del idx_ref  # consumed by the index maps only
        f32 = jnp.float32
        b = pl.program_id(0)
        r = pl.program_id(1)

        @pl.when(jnp.logical_and(b == 0, r == 0))
        def _init():
            acc_ref[...] = jnp.zeros_like(acc_ref)

        # image modality: weighted partial sum of squared error for this chunk
        d1 = p1_ref[...].astype(f32) - x1_ref[...].astype(f32)
        sq = d1 * d1
        if vpu_only:
            # sublane-grouped reduction: pure VPU adds into the resident (8,128) accumulator
            acc_ref[...] = acc_ref[...] + img_w * jnp.sum(sq.reshape(-1, 8, 128), axis=0)
        else:
            acc_ref[0:1, 0:1] = acc_ref[0:1, 0:1] + img_w * jnp.sum(sq, keepdims=True)

        # finalize once, on the last grid step: modality-0, scaling, correlation term
        @pl.when(jnp.logical_and(b == pl.num_programs(0) - 1,
                                 r == pl.num_programs(1) - 1))
        def _finalize():
            d0 = p0_ref[...].astype(f32) - x0_ref[...].astype(f32)      # (B, D0)
            ss0 = jnp.sum(d0 * d0, keepdims=True)                       # (1, 1)
            recon = (jnp.sum(acc_ref[...], keepdims=True) + inv_d0 * ss0) * inv_terms

            hh0 = h0_ref[...].astype(f32)                               # (B, Hd)
            hh1 = h1_ref[...].astype(f32)
            if center:
                v0 = hh0 - jnp.mean(hh0, axis=0, keepdims=True)
                v1 = hh1 - jnp.mean(hh1, axis=0, keepdims=True)
            else:
                v0, v1 = hh0, hh1
            num = jnp.sum(v0 * v1, axis=0, keepdims=True)               # (1, Hd)
            n0 = jnp.sqrt(jnp.sum(hh0 * hh0, axis=0, keepdims=True))    # un-centered norms
            n1 = jnp.sqrt(jnp.sum(hh1 * hh1, axis=0, keepdims=True))
            corr = jnp.sum(num / (n0 * n1 + EPS), keepdims=True)        # (1, 1)

            out_ref[...] = recon - corr_lambda * corr

    def full2d(a):
        # whole small array as one block, constant index -> DMA'd once for the entire grid
        return pl.BlockSpec(a.shape, lambda b, r, i: (0, 0))

    grid_spec = pltpu.PrefetchScalarGridSpec(
        num_scalar_prefetch=1,
        grid=(B, NR),
        in_specs=[p1_spec, x1_spec, full2d(p0g), full2d(x0g),
                  full2d(h0f), full2d(h1f)],
        out_specs=pl.BlockSpec((1, 1), lambda b, r, i: (0, 0)),
        scratch_shapes=[pltpu.VMEM((8, 128), jnp.float32)],
    )

    out = pl.pallas_call(
        kernel,
        grid_spec=grid_spec,
        out_shape=jax.ShapeDtypeStruct((1, 1), jnp.float32),
        compiler_params=pltpu.CompilerParams(
            dimension_semantics=("arbitrary", "arbitrary")),
    )(idx, p1v, x1t, p0g, x0g, h0f, h1f)
    return out[0, 0]


def tml_loss_reference(model_output, input_modalities, lengths,
                       corr_lambda=0.5, modalities_lambda=2.0):
    """Pure-JAX mirror of the PyTorch forward (for validation)."""
    _f, (pred0, pred1), hidden_states = model_output
    inp0, inp1 = input_modalities
    B = pred0.shape[0]
    idx = lengths - 1
    loss = 0.0
    for b in range(B):                                   # modality 0: nn.MSELoss()
        p = pred0[b, idx[b]]
        x = inp0[b, idx[b]]
        loss = loss + jnp.mean((p - x) ** 2)
    for b in range(B):                                   # modality 1: img_loss
        p = pred1[b, idx[b]]                             # [C,H,W]
        x = jnp.transpose(inp1[b, idx[b]], (2, 0, 1))    # HWC -> CHW
        loss = loss + modalities_lambda * jnp.mean((p - x) ** 2)
    recon = loss / (2 * B)

    h0 = hidden_states[0][0][0]                          # [B, Hd]
    h1 = hidden_states[1][0][0]
    if B > 1:
        v0 = h0 - jnp.mean(h0, axis=0, keepdims=True)
        v1 = h1 - jnp.mean(h1, axis=0, keepdims=True)
    else:
        v0, v1 = h0, h1
    num = jnp.sum(v0 * v1, axis=0)
    n0 = jnp.sqrt(jnp.sum(h0 * h0, axis=0))
    n1 = jnp.sqrt(jnp.sum(h1 * h1, axis=0))
    corr = jnp.sum(num / (n0 * n1 + 1e-7))
    return recon - corr_lambda * corr


if __name__ == "__main__":
    key = jax.random.PRNGKey(0)
    B, T, D0, C, H, W, Hd = 2, 8, 32, 4, 16, 16, 32
    ks = jax.random.split(key, 8)

    pred0 = jax.random.normal(ks[0], (B, T, D0), jnp.float32)
    inp0 = jax.random.normal(ks[1], (B, T, D0), jnp.float32)
    pred1 = jax.random.normal(ks[2], (B, T, C, H, W), jnp.float32)
    inp1 = jax.random.normal(ks[3], (B, T, H, W, C), jnp.float32)
    h0 = jax.random.normal(ks[4], (1, B, Hd), jnp.float32)
    c0 = jax.random.normal(ks[5], (1, B, Hd), jnp.float32)
    h1 = jax.random.normal(ks[6], (1, B, Hd), jnp.float32)
    c1 = jax.random.normal(ks[7], (1, B, Hd), jnp.float32)
    lengths = jnp.array([T, T - 3], dtype=jnp.int32)

    # model_output = (features_modalities, predicted_modalities, hidden_states_modalities)
    features = None  # features_modalities is unused by the loss
    model_output = (features, (pred0, pred1), ((h0, c0), (h1, c1)))
    input_modalities = (inp0, inp1)

    corr_lambda, modalities_lambda = 0.5, 2.0   # deterministic "parameters" from __init__ kwargs

    out = tml_loss_forward(model_output, input_modalities, lengths,
                           corr_lambda, modalities_lambda)
    out = jax.block_until_ready(out)
    ref = tml_loss_reference(model_output, input_modalities, lengths,
                             corr_lambda, modalities_lambda)

    assert bool(jnp.isfinite(out)), out
    assert abs(float(out) - float(ref)) <= 1e-4 * max(1.0, abs(float(ref))), (float(out), float(ref))
    print("KERNEL_OK")
</pallas_src>

<mosaic_0001>
module attributes {stable_mosaic.version = 11 : i64} {
  func.func @kernel(%arg0: i32, %arg1: i32, %arg2: memref<2xi32, #tpu.memory_space<smem>>, %arg3: memref<1x1x8x128xf32, #tpu.memory_space<vmem>>, %arg4: memref<1x8x128xf32, #tpu.memory_space<vmem>>, %arg5: memref<2x32xf32, #tpu.memory_space<vmem>>, %arg6: memref<2x32xf32, #tpu.memory_space<vmem>>, %arg7: memref<2x32xf32, #tpu.memory_space<vmem>>, %arg8: memref<2x32xf32, #tpu.memory_space<vmem>>, %arg9: memref<1x1xf32, #tpu.memory_space<vmem>>, %arg10: memref<8x128xf32, #tpu.memory_space<vmem>>) attributes {dimension_semantics = [#tpu.dimension_semantics<arbitrary>, #tpu.dimension_semantics<arbitrary>], iteration_bounds = array<i64: 2, 1>, scalar_prefetch = 1 : i64, scratch_operands = 1 : i64, tpu.core_type = #tpu.core_type<tc>, window_params = [{transform_indices = @transform_0, window_bounds = array<i64: 1, 1, 8, 128>}, {transform_indices = @transform_1, window_bounds = array<i64: 1, 8, 128>}, {pipeline_mode = #tpu.pipeline_mode<synchronous>, transform_indices = @transform_2, window_bounds = array<i64: 2, 32>}, {pipeline_mode = #tpu.pipeline_mode<synchronous>, transform_indices = @transform_3, window_bounds = array<i64: 2, 32>}, {pipeline_mode = #tpu.pipeline_mode<synchronous>, transform_indices = @transform_4, window_bounds = array<i64: 2, 32>}, {pipeline_mode = #tpu.pipeline_mode<synchronous>, transform_indices = @transform_5, window_bounds = array<i64: 2, 32>}, {pipeline_mode = #tpu.pipeline_mode<synchronous>, transform_indices = @transform_6, window_bounds = array<i64: 1, 1>}]} {
    %c0_i32 = arith.constant 0 : i32
    %0 = arith.cmpi eq, %arg0, %c0_i32 : i32
    %c0_i32_0 = arith.constant 0 : i32
    %1 = arith.cmpi eq, %arg1, %c0_i32_0 : i32
    %2 = arith.andi %0, %1 : i1
    %3 = arith.extui %2 : i1 to i32
    %c0_i32_1 = arith.constant 0 : i32
    %4 = arith.cmpi ne, %3, %c0_i32_1 : i32
    scf.if %4 {
      %cst_15 = arith.constant 0.000000e+00 : f32
      %23 = vector.broadcast %cst_15 : f32 to vector<8x128xf32>
      %c0_16 = arith.constant 0 : index
      %c0_17 = arith.constant 0 : index
      %24 = vector.load %arg10[%c0_16, %c0_17] : memref<8x128xf32, #tpu.memory_space<vmem>>, vector<8x128xf32>
      tpu.vector_store %arg10[%c0_16, %c0_17], %23 {strides = array<i32>} : memref<8x128xf32, #tpu.memory_space<vmem>>, vector<8x128xf32>,
    } else {
    }
    %c0 = arith.constant 0 : index
    %c0_2 = arith.constant 0 : index
    %c0_3 = arith.constant 0 : index
    %c0_4 = arith.constant 0 : index
    %5 = vector.load %arg3[%c0, %c0_2, %c0_3, %c0_4] : memref<1x1x8x128xf32, #tpu.memory_space<vmem>>, vector<1x1x8x128xf32>
    %6 = vector.shape_cast %5 : vector<1x1x8x128xf32> to vector<8x128xf32>
    %c0_5 = arith.constant 0 : index
    %c0_6 = arith.constant 0 : index
    %c0_7 = arith.constant 0 : index
    %7 = vector.load %arg4[%c0_5, %c0_6, %c0_7] : memref<1x8x128xf32, #tpu.memory_space<vmem>>, vector<1x8x128xf32>
    %8 = vector.shape_cast %7 : vector<1x8x128xf32> to vector<8x128xf32>
    %9 = arith.subf %6, %8 : vector<8x128xf32>
    %10 = arith.mulf %9, %9 : vector<8x128xf32>
    %c0_8 = arith.constant 0 : index
    %c0_9 = arith.constant 0 : index
    %11 = vector.load %arg10[%c0_8, %c0_9] : memref<8x128xf32, #tpu.memory_space<vmem>>, vector<8x128xf32>
    %12 = vector.shape_cast %10 : vector<8x128xf32> to vector<1x8x128xf32>
    %cst = arith.constant dense<0.000000e+00> : vector<8x128xf32>
    %13 = vector.multi_reduction <add>, %12, %cst [0] : vector<1x8x128xf32> to vector<8x128xf32>
    %cst_10 = arith.constant 0.001953125 : f32
    %14 = vector.broadcast %cst_10 : f32 to vector<8x128xf32>
    %15 = arith.mulf %14, %13 : vector<8x128xf32>
    %16 = arith.addf %11, %15 : vector<8x128xf32>
    %c0_11 = arith.constant 0 : index
    %c0_12 = arith.constant 0 : index
    %17 = vector.load %arg10[%c0_11, %c0_12] : memref<8x128xf32, #tpu.memory_space<vmem>>, vector<8x128xf32>
    tpu.vector_store %arg10[%c0_11, %c0_12], %16 {strides = array<i32>} : memref<8x128xf32, #tpu.memory_space<vmem>>, vector<8x128xf32>,
    %c1_i32 = arith.constant 1 : i32
    %18 = arith.cmpi eq, %arg0, %c1_i32 : i32
    %c0_i32_13 = arith.constant 0 : i32
    %19 = arith.cmpi eq, %arg1, %c0_i32_13 : i32
    %20 = arith.andi %18, %19 : i1
    %21 = arith.extui %20 : i1 to i32
    %c0_i32_14 = arith.constant 0 : i32
    %22 = arith.cmpi ne, %21, %c0_i32_14 : i32
    scf.if %22 {
      %c0_15 = arith.constant 0 : index
      %c0_16 = arith.constant 0 : index
      %23 = vector.load %arg5[%c0_15, %c0_16] : memref<2x32xf32, #tpu.memory_space<vmem>>, vector<2x32xf32>
      %c0_17 = arith.constant 0 : index
      %c0_18 = arith.constant 0 : index
      %24 = vector.load %arg6[%c0_17, %c0_18] : memref<2x32xf32, #tpu.memory_space<vmem>>, vector<2x32xf32>
      %25 = arith.subf %23, %24 : vector<2x32xf32>
      %26 = arith.mulf %25, %25 : vector<2x32xf32>
      %27 = vector.shape_cast %26 : vector<2x32xf32> to vector<1x2x32xf32>
      %cst_19 = arith.constant dense<0.000000e+00> : vector<1xf32>
      %28 = vector.multi_reduction <add>, %27, %cst_19 [1, 2] : vector<1x2x32xf32> to vector<1xf32>
      %29 = vector.shape_cast %28 : vector<1xf32> to vector<1x1x1xf32>
      %30 = vector.extract %29[0, 0, 0] : f32 from vector<1x1x1xf32>
      %31 = vector.broadcast %30 : f32 to vector<1x1xf32>
      %c0_20 = arith.constant 0 : index
      %c0_21 = arith.constant 0 : index
      %32 = vector.load %arg10[%c0_20, %c0_21] : memref<8x128xf32, #tpu.memory_space<vmem>>, vector<8x128xf32>
      %33 = vector.shape_cast %32 : vector<8x128xf32> to vector<1x8x128xf32>
      %cst_22 = arith.constant dense<0.000000e+00> : vector<1xf32>
      %34 = vector.multi_reduction <add>, %33, %cst_22 [1, 2] : vector<1x8x128xf32> to vector<1xf32>
      %35 = vector.shape_cast %34 : vector<1xf32> to vector<1x1x1xf32>
      %36 = vector.extract %35[0, 0, 0] : f32 from vector<1x1x1xf32>
      %37 = vector.broadcast %36 : f32 to vector<1x1xf32>
      %cst_23 = arith.constant 3.125000e-02 : f32
      %38 = vector.broadcast %cst_23 : f32 to vector<1x1xf32>
      %39 = arith.mulf %38, %31 : vector<1x1xf32>
      %40 = arith.addf %37, %39 : vector<1x1xf32>
      %cst_24 = arith.constant 2.500000e-01 : f32
      %41 = vector.broadcast %cst_24 : f32 to vector<1x1xf32>
      %42 = arith.mulf %40, %41 : vector<1x1xf32>
      %c0_25 = arith.constant 0 : index
      %c0_26 = arith.constant 0 : index
      %43 = vector.load %arg7[%c0_25, %c0_26] : memref<2x32xf32, #tpu.memory_space<vmem>>, vector<2x32xf32>
      %c0_27 = arith.constant 0 : index
      %c0_28 = arith.constant 0 : index
      %44 = vector.load %arg8[%c0_27, %c0_28] : memref<2x32xf32, #tpu.memory_space<vmem>>, vector<2x32xf32>
      %cst_29 = arith.constant dense<0.000000e+00> : vector<32xf32>
      %45 = vector.multi_reduction <add>, %43, %cst_29 [0] : vector<2x32xf32> to vector<32xf32>
      %46 = vector.shape_cast %45 : vector<32xf32> to vector<1x32xf32>
      %cst_30 = arith.constant 2.000000e+00 : f32
      %47 = vector.broadcast %cst_30 : f32 to vector<1x32xf32>
      %48 = arith.divf %46, %47 : vector<1x32xf32>
      %49 = vector.broadcast %48 : vector<1x32xf32> to vector<2x32xf32>
      %50 = arith.subf %43, %49 : vector<2x32xf32>
      %cst_31 = arith.constant dense<0.000000e+00> : vector<32xf32>
      %51 = vector.multi_reduction <add>, %44, %cst_31 [0] : vector<2x32xf32> to vector<32xf32>
      %52 = vector.shape_cast %51 : vector<32xf32> to vector<1x32xf32>
      %cst_32 = arith.constant 2.000000e+00 : f32
      %53 = vector.broadcast %cst_32 : f32 to vector<1x32xf32>
      %54 = arith.divf %52, %53 : vector<1x32xf32>
      %55 = vector.broadcast %54 : vector<1x32xf32> to vector<2x32xf32>
      %56 = arith.subf %44, %55 : vector<2x32xf32>
      %57 = arith.mulf %50, %56 : vector<2x32xf32>
      %cst_33 = arith.constant dense<0.000000e+00> : vector<32xf32>
      %58 = vector.multi_reduction <add>, %57, %cst_33 [0] : vector<2x32xf32> to vector<32xf32>
      %59 = vector.shape_cast %58 : vector<32xf32> to vector<1x32xf32>
      %60 = arith.mulf %43, %43 : vector<2x32xf32>
      %cst_34 = arith.constant dense<0.000000e+00> : vector<32xf32>
      %61 = vector.multi_reduction <add>, %60, %cst_34 [0] : vector<2x32xf32> to vector<32xf32>
      %62 = vector.shape_cast %61 : vector<32xf32> to vector<1x32xf32>
      %63 = math.sqrt %62 : vector<1x32xf32>
      %64 = arith.mulf %44, %44 : vector<2x32xf32>
      %cst_35 = arith.constant dense<0.000000e+00> : vector<32xf32>
      %65 = vector.multi_reduction <add>, %64, %cst_35 [0] : vector<2x32xf32> to vector<32xf32>
      %66 = vector.shape_cast %65 : vector<32xf32> to vector<1x32xf32>
      %67 = math.sqrt %66 : vector<1x32xf32>
      %68 = arith.mulf %63, %67 : vector<1x32xf32>
      %cst_36 = arith.constant 1.000000e-07 : f32
      %69 = vector.broadcast %cst_36 : f32 to vector<1x32xf32>
      %70 = arith.addf %68, %69 : vector<1x32xf32>
      %71 = arith.divf %59, %70 : vector<1x32xf32>
      %72 = vector.shape_cast %71 : vector<1x32xf32> to vector<1x1x32xf32>
      %cst_37 = arith.constant dense<0.000000e+00> : vector<1xf32>
      %73 = vector.multi_reduction <add>, %72, %cst_37 [1, 2] : vector<1x1x32xf32> to vector<1xf32>
      %74 = vector.shape_cast %73 : vector<1xf32> to vector<1x1x1xf32>
      %75 = vector.extract %74[0, 0, 0] : f32 from vector<1x1x1xf32>
      %76 = vector.broadcast %75 : f32 to vector<1x1xf32>
      %cst_38 = arith.constant 5.000000e-01 : f32
      %77 = vector.broadcast %cst_38 : f32 to vector<1x1xf32>
      %78 = arith.mulf %77, %76 : vector<1x1xf32>
      %79 = arith.subf %42, %78 : vector<1x1xf32>
      %c0_39 = arith.constant 0 : index
      %c0_40 = arith.constant 0 : index
      %80 = vector.load %arg9[%c0_39, %c0_40] : memref<1x1xf32, #tpu.memory_space<vmem>>, vector<1x1xf32>
      tpu.vector_store %arg9[%c0_39, %c0_40], %79 {strides = array<i32>} : memref<1x1xf32, #tpu.memory_space<vmem>>, vector<1x1xf32>,
    } else {
    }
    return
  }
  func.func @transform_0(%arg0: i32, %arg1: i32, %arg2: memref<2xi32, #tpu.memory_space<smem>>) -> (i32, i32, i32, i32) {
    %0 = arith.index_cast %arg0 : i32 to index
    %1 = memref.load %arg2[%0] : memref<2xi32, #tpu.memory_space<smem>>
    %c0_i32 = arith.constant 0 : i32
    %c0_i32_0 = arith.constant 0 : i32
    return %arg0, %1, %arg1, %c0_i32 : i32, i32, i32, i32
  }
  func.func @transform_1(%arg0: i32, %arg1: i32, %arg2: memref<2xi32, #tpu.memory_space<smem>>) -> (i32, i32, i32) {
    %c0_i32 = arith.constant 0 : i32
    %c0_i32_0 = arith.constant 0 : i32
    return %arg0, %arg1, %c0_i32 : i32, i32, i32
  }
  func.func @transform_2(%arg0: i32, %arg1: i32, %arg2: memref<2xi32, #tpu.memory_space<smem>>) -> (i32, i32) {
    %c0_i32 = arith.constant 0 : i32
    %c0_i32_0 = arith.constant 0 : i32
    %c0_i32_1 = arith.constant 0 : i32
    return %c0_i32, %c0_i32_0 : i32, i32
  }
  func.func @transform_3(%arg0: i32, %arg1: i32, %arg2: memref<2xi32, #tpu.memory_space<smem>>) -> (i32, i32) {
    %c0_i32 = arith.constant 0 : i32
    %c0_i32_0 = arith.constant 0 : i32
    %c0_i32_1 = arith.constant 0 : i32
    return %c0_i32, %c0_i32_0 : i32, i32
  }
  func.func @transform_4(%arg0: i32, %arg1: i32, %arg2: memref<2xi32, #tpu.memory_space<smem>>) -> (i32, i32) {
    %c0_i32 = arith.constant 0 : i32
    %c0_i32_0 = arith.constant 0 : i32
    %c0_i32_1 = arith.constant 0 : i32
    return %c0_i32, %c0_i32_0 : i32, i32
  }
  func.func @transform_5(%arg0: i32, %arg1: i32, %arg2: memref<2xi32, #tpu.memory_space<smem>>) -> (i32, i32) {
    %c0_i32 = arith.constant 0 : i32
    %c0_i32_0 = arith.constant 0 : i32
    %c0_i32_1 = arith.constant 0 : i32
    return %c0_i32, %c0_i32_0 : i32, i32
  }
  func.func @transform_6(%arg0: i32, %arg1: i32, %arg2: memref<2xi32, #tpu.memory_space<smem>>) -> (i32, i32) {
    %c0_i32 = arith.constant 0 : i32
    %c0_i32_0 = arith.constant 0 : i32
    %c0_i32_1 = arith.constant 0 : i32
    return %c0_i32, %c0_i32_0 : i32, i32
  }
}

</mosaic_0001>

<llo_original>
// kernel: tpu_custom_call.1
$region0: #{tpu_custom_call.1}
  #allocation0 [shape = 'u32[]', space=smem, size = 0x4, offset = 0x4, fixed_abs, tag = 'smem constant byte address 0x4 - core index']
  #allocation1 [shape = 'u32[144,128]{1,0:T(1,128)}', space=vmem, size = 0x12000, scoped, tag = 'internal scratch']
  #allocation2 [shape = 'f32[8,128]{1,0:T(8,128)}', space=vmem, size = 0x1000, scoped, tag = 'scratch operand']
  #allocation3 [shape = 's32[1]{0}', space=sflag, size = 0x4, scoped, tag = 'scoped memory for tpu_custom_call.1']
  #allocation4 [shape = 'u8[512]{0}', space=smem, size = 0x200, scoped, tag = 'prefetched SMEM operand 0']
  %s0 = inlined_call_operand.hbm [shape: s32[2], index: 0, kind: input, shape index: {}]
  %s1 = inlined_call_operand.hbm [shape: f32[2,8,8,128], index: 1, kind: input, shape index: {}]
  %s2 = inlined_call_operand.hbm [shape: f32[2,8,128], index: 2, kind: input, shape index: {}]
  %s3 = inlined_call_operand.vmem [shape: f32[2,32], index: 3, kind: input, shape index: {}]
  %s4 = inlined_call_operand.vmem [shape: f32[2,32], index: 4, kind: input, shape index: {}]
  %s5 = inlined_call_operand.vmem [shape: f32[2,32], index: 5, kind: input, shape index: {}]
  %s6 = inlined_call_operand.vmem [shape: f32[2,32], index: 6, kind: input, shape index: {}]
  %s7 = inlined_call_operand.hbm [shape: f32[1,1], index: 7, kind: output, shape index: {}]
  %s8 = sld [smem:[#allocation0]]
  $region73: #{tpu_custom_call.1} parent=0
    _
  %s10 = ssub.s32 1, %s8
  %s11 = scalar_select 0, %s10, %s8
  %13 = dma.hbm_to_smem %s0, 16, [#allocation4], [#allocation3]
  %14 = dma.done [#allocation3], 16
  %15 = sfence
  $region1: #{tpu_custom_call.1} parent=0
    #allocation5 [shape = 'u8[8192]{0}', space=vmem, size = 0x2000, scoped, tag = 'input window, operand 1']
    #allocation6 [shape = 's32[2]{0}', space=sflag, size = 0x8, scoped, tag = 'scoped memory for tpu_custom_call.1']
    #allocation7 [shape = 's32[2]{0}', space=sflag, size = 0x8, scoped, tag = 'scoped memory for tpu_custom_call.1']
    #allocation8 [shape = 'u8[8192]{0}', space=vmem, size = 0x2000, scoped, tag = 'input window, operand 2']
    #allocation9 [shape = 's32[2]{0}', space=sflag, size = 0x8, scoped, tag = 'scoped memory for tpu_custom_call.1']
    #allocation10 [shape = 'u8[512]{0}', space=vmem, size = 0x400, scoped, tag = 'output window, operand 0, single buffered']
    %16 = vsyncpa [#allocation6], 0
    %s17 = scalar_lea.sflag [#allocation6], 1
    %18 = vsyncpa %s17, 0
    %19 = vsyncpa [#allocation9], 0
    %s20 = scalar_lea.sflag [#allocation9], 1
    %21 = vsyncpa %s20, 0
    %22 = vsyncpa [#allocation7], 0
    loop: start=0, step=1, limit=4
    $region2: #{tpu_custom_call.1} parent=1 // loop_pre_header
      _
    $region3: #{tpu_custom_call.1} parent=1 // loop_header
      %s24 = sphi 0, %s28
      %p25 = scmp.ge.s32.totalorder %s24, 4
      %s31 = sphi 0, %s43
      %s32 = sphi 0, %s39
      %s33 = sphi 0, %s31
      %s34 = sphi 0, %s32
      %s35 = sphi 0, %s33
      %s36 = sphi 0, %s34
      %s52 = sphi 0, %s54
      %s55 = sphi 0, %s52
      %s56 = sphi 0, %s55
      %s72 = sphi 0, %s56
      %s80 = sphi 0, %s82
      %s83 = sphi 0, %s80
      %s84 = sphi 0, %s83
      %s100 = sphi 0, %s84
      %s104 = sphi 0, %s104
      %s106 = sphi 0, %s104
      %s107 = sphi 0, %s106
      %s121 = sphi 0, %s107
      %s125 = sphi 0, %s125
      %s127 = sphi 0, %s125
      %s128 = sphi 0, %s127
      %s142 = sphi 0, %s128
      %s146 = sphi 0, %s146
      %s148 = sphi 0, %s146
      %s149 = sphi 0, %s148
      %s163 = sphi 0, %s149
      %s167 = sphi 0, %s167
      %s169 = sphi 0, %s167
      %s170 = sphi 0, %s169
      %s184 = sphi 0, %s170
      %s188 = sphi 0, %s188
      %s190 = sphi 0, %s188
      %s191 = sphi 0, %s190
      %s205 = sphi 0, %s191
    $region4: #{tpu_custom_call.1} parent=1 // loop_header_branch
      %27 = sbr.rel (%p25) target = $region8
    $region5: #{tpu_custom_call.1} parent=1 // loop_body
      %s29 = ssub.s32 %s24, 1
      %s30 = ssub.s32 %s24, 2
      %s37 = sadd.s32 1, %s32
      %p38 = scmp.ge.s32.totalorder %s37, 1
      %s39 = scalar_select %p38, 0, %s37
      %s40 = sadd.s32 1, %s31
      %s41 = scalar_select %p38, %s40, %s31
      %p42 = scmp.ge.s32.totalorder %s41, 2
      %s43 = scalar_select %p42, 0, %s41
      %s44 = sld [smem:[#allocation4 + %s31]]
      %s45 = sld [smem:[#allocation4 + %s43]]
      %s46 = ssub.s32 %s31, %s43
      %s47 = ssub.s32 %s44, %s45
      %s48 = sor.u32 %s46, %s47
      %s49 = ssub.s32 %s32, %s39
      %s50 = sor.u32 %s48, %s49
      %p51 = scmp.eq.s32.totalorder %s50, 0
      %s53 = sadd.s32 %s52, 1
      %s54 = scalar_select %p51, %s52, %s53
      %p57 = pneg %p51
      %p58 = scmp.eq.s32.totalorder %s24, 1
      %p59 = por %p57, %p58
      %p60 = scmp.ne.s32.totalorder %s52, %s55
      %p61 = scmp.eq.s32.totalorder %s24, 0
      %p62 = por %p60, %p61
      %p63 = scmp.ne.s32.totalorder %s52, %s55
      %p64 = scmp.eq.s32.totalorder %s29, 1
      %p65 = por %p63, %p64
      %p66 = scmp.ne.s32.totalorder %s55, %s56
      %p67 = scmp.eq.s32.totalorder %s29, 0
      %p68 = por %p66, %p67
      %p69 = scmp.ne.s32.totalorder %s55, %s56
      %p70 = scmp.eq.s32.totalorder %s30, 1
      %p71 = por %p69, %p70
      %p73 = scmp.ne.s32.totalorder %s56, %s72
      %p74 = scmp.eq.s32.totalorder %s30, 0
      %p75 = por %p73, %p74
      %s76 = ssub.s32 %s31, %s43
      %s77 = ssub.s32 %s32, %s39
      %s78 = sor.u32 %s76, %s77
      %p79 = scmp.eq.s32.totalorder %s78, 0
      %s81 = sadd.s32 %s80, 1
      %s82 = scalar_select %p79, %s80, %s81
      %p85 = pneg %p79
      %p86 = scmp.eq.s32.totalorder %s24, 1
      %p87 = por %p85, %p86
      %p88 = scmp.ne.s32.totalorder %s80, %s83
      %p89 = scmp.eq.s32.totalorder %s24, 0
      %p90 = por %p88, %p89
      %p91 = scmp.ne.s32.totalorder %s80, %s83
      %p92 = scmp.eq.s32.totalorder %s29, 1
      %p93 = por %p91, %p92
      %p94 = scmp.ne.s32.totalorder %s83, %s84
      %p95 = scmp.eq.s32.totalorder %s29, 0
      %p96 = por %p94, %p95
      %p97 = scmp.ne.s32.totalorder %s83, %s84
      %p98 = scmp.eq.s32.totalorder %s30, 1
      %p99 = por %p97, %p98
      %p101 = scmp.ne.s32.totalorder %s84, %s100
      %p102 = scmp.eq.s32.totalorder %s30, 0
      %p103 = por %p101, %p102
      %s105 = sadd.s32 %s104, 1
      %p108 = scmp.eq.s32.totalorder %s24, 1
      %p109 = scmp.ne.s32.totalorder %s104, %s106
      %p110 = scmp.eq.s32.totalorder %s24, 0
      %p111 = por %p109, %p110
      %p112 = scmp.ne.s32.totalorder %s104, %s106
      %p113 = scmp.eq.s32.totalorder %s29, 1
      %p114 = por %p112, %p113
      %p115 = scmp.ne.s32.totalorder %s106, %s107
      %p116 = scmp.eq.s32.totalorder %s29, 0
      %p117 = por %p115, %p116
      %p118 = scmp.ne.s32.totalorder %s106, %s107
      %p119 = scmp.eq.s32.totalorder %s30, 1
      %p120 = por %p118, %p119
      %p122 = scmp.ne.s32.totalorder %s107, %s121
      %p123 = scmp.eq.s32.totalorder %s30, 0
      %p124 = por %p122, %p123
      %s126 = sadd.s32 %s125, 1
      %p129 = scmp.eq.s32.totalorder %s24, 1
      %p130 = scmp.ne.s32.totalorder %s125, %s127
      %p131 = scmp.eq.s32.totalorder %s24, 0
      %p132 = por %p130, %p131
      %p133 = scmp.ne.s32.totalorder %s125, %s127
      %p134 = scmp.eq.s32.totalorder %s29, 1
      %p135 = por %p133, %p134
      %p136 = scmp.ne.s32.totalorder %s127, %s128
      %p137 = scmp.eq.s32.totalorder %s29, 0
      %p138 = por %p136, %p137
      %p139 = scmp.ne.s32.totalorder %s127, %s128
      %p140 = scmp.eq.s32.totalorder %s30, 1
      %p141 = por %p139, %p140
      %p143 = scmp.ne.s32.totalorder %s128, %s142
      %p144 = scmp.eq.s32.totalorder %s30, 0
      %p145 = por %p143, %p144
      %s147 = sadd.s32 %s146, 1
      %p150 = scmp.eq.s32.totalorder %s24, 1
      %p151 = scmp.ne.s32.totalorder %s146, %s148
      %p152 = scmp.eq.s32.totalorder %s24, 0
      %p153 = por %p151, %p152
      %p154 = scmp.ne.s32.totalorder %s146, %s148
      %p155 = scmp.eq.s32.totalorder %s29, 1
      %p156 = por %p154, %p155
      %p157 = scmp.ne.s32.totalorder %s148, %s149
      %p158 = scmp.eq.s32.totalorder %s29, 0
      %p159 = por %p157, %p158
      %p160 = scmp.ne.s32.totalorder %s148, %s149
      %p161 = scmp.eq.s32.totalorder %s30, 1
      %p162 = por %p160, %p161
      %p164 = scmp.ne.s32.totalorder %s149, %s163
      %p165 = scmp.eq.s32.totalorder %s30, 0
      %p166 = por %p164, %p165
      %s168 = sadd.s32 %s167, 1
      %p171 = scmp.eq.s32.totalorder %s24, 1
      %p172 = scmp.ne.s32.totalorder %s167, %s169
      %p173 = scmp.eq.s32.totalorder %s24, 0
      %p174 = por %p172, %p173
      %p175 = scmp.ne.s32.totalorder %s167, %s169
      %p176 = scmp.eq.s32.totalorder %s29, 1
      %p177 = por %p175, %p176
      %p178 = scmp.ne.s32.totalorder %s169, %s170
      %p179 = scmp.eq.s32.totalorder %s29, 0
      %p180 = por %p178, %p179
      %p181 = scmp.ne.s32.totalorder %s169, %s170
      %p182 = scmp.eq.s32.totalorder %s30, 1
      %p183 = por %p181, %p182
      %p185 = scmp.ne.s32.totalorder %s170, %s184
      %p186 = scmp.eq.s32.totalorder %s30, 0
      %p187 = por %p185, %p186
      %s189 = sadd.s32 %s188, 1
      %p192 = scmp.eq.s32.totalorder %s24, 1
      %p193 = scmp.ne.s32.totalorder %s188, %s190
      %p194 = scmp.eq.s32.totalorder %s24, 0
      %p195 = por %p193, %p194
      %p196 = scmp.ne.s32.totalorder %s188, %s190
      %p197 = scmp.eq.s32.totalorder %s29, 1
      %p198 = por %p196, %p197
      %p199 = scmp.ne.s32.totalorder %s190, %s191
      %p200 = scmp.eq.s32.totalorder %s29, 0
      %p201 = por %p199, %p200
      %p202 = scmp.ne.s32.totalorder %s190, %s191
      %p203 = scmp.eq.s32.totalorder %s30, 1
      %p204 = por %p202, %p203
      %p206 = scmp.ne.s32.totalorder %s191, %s205
      %p207 = scmp.eq.s32.totalorder %s30, 0
      %p208 = por %p206, %p207
      %p209 = scmp.le.s32.totalorder 1, %s24
      %p210 = scmp.lt.s32.totalorder %s24, 3
      %p211 = pnand %p209, %p210
      %p212 = pneg %p211
      // Predicated region
      $region9: #{tpu_custom_call.1} parent=5 // pred_check
        _
      $region10: #{tpu_custom_call.1} parent=5 // pred_check_branch
        %214 = sbr.rel (%p211) target = $region12
      $region11: #{tpu_custom_call.1} parent=5 // pred_region
        %s215 = ssub.s32 %s24, 1
        // Predicated region
        $region13: #{tpu_custom_call.1} parent=11 // pred_check
          %p216 = pneg %p117
        $region14: #{tpu_custom_call.1} parent=11 // pred_check_branch
          %218 = sbr.rel (%p216) target = $region16
        $region15: #{tpu_custom_call.1} parent=11 // pred_region
          _
        $region16: #{tpu_custom_call.1} parent=11 // pred_fallthru
          _
        // Predicated region
        $region17: #{tpu_custom_call.1} parent=11 // pred_check
          %p219 = pneg %p138
        $region18: #{tpu_custom_call.1} parent=11 // pred_check_branch
          %221 = sbr.rel (%p219) target = $region20
        $region19: #{tpu_custom_call.1} parent=11 // pred_region
          _
        $region20: #{tpu_custom_call.1} parent=11 // pred_fallthru
          _
        // Predicated region
        $region21: #{tpu_custom_call.1} parent=11 // pred_check
          %p222 = pneg %p159
        $region22: #{tpu_custom_call.1} parent=11 // pred_check_branch
          %224 = sbr.rel (%p222) target = $region24
        $region23: #{tpu_custom_call.1} parent=11 // pred_region
          _
        $region24: #{tpu_custom_call.1} parent=11 // pred_fallthru
          _
        // Predicated region
        $region25: #{tpu_custom_call.1} parent=11 // pred_check
          %p225 = pneg %p180
        $region26: #{tpu_custom_call.1} parent=11 // pred_check_branch
          %227 = sbr.rel (%p225) target = $region28
        $region27: #{tpu_custom_call.1} parent=11 // pred_region
          _
        $region28: #{tpu_custom_call.1} parent=11 // pred_fallthru
          _
      $region12: #{tpu_custom_call.1} parent=5 // pred_fallthru
        _
      %p228 = scmp.lt.s32.totalorder %s24, 2
      // Predicated region
      $region29: #{tpu_custom_call.1} parent=5 // pred_check
        %p229 = pneg %p228
      $region30: #{tpu_custom_call.1} parent=5 // pred_check_branch
        %231 = sbr.rel (%p229) target = $region32
      $region31: #{tpu_custom_call.1} parent=5 // pred_region
        // Predicated region
        $region33: #{tpu_custom_call.1} parent=31 // pred_check
          %p232 = pneg %p62
        $region34: #{tpu_custom_call.1} parent=31 // pred_check_branch
          %234 = sbr.rel (%p232) target = $region36
        $region35: #{tpu_custom_call.1} parent=31 // pred_region
          %s235 = sand.u32 %s52, 1
          %s236 = scalar_lea.sflag [#allocation6], %s235
          %s237 = sand.u32 %s52, 1
          %s238 = smul.addr %s237, 8
          %s239 = scalar_lea.vmem [#allocation5], %s238
          %s240 = sld [smem:[#allocation4 + %s31]]
          %s242 = ssub.s32 128, 128
          %243 = vsyncadd %s236, %s242
          %s244 = sadd.s32 %s32, %s240
          %s245 = smul.addr %s31, 8
          %s246 = sadd.s32 %s244, %s245
          %s247 = smul.addr %s246, 128
          %s248 = scalar_lea.hbm %s1, %s247
          %s250 = sshll.u32 %s239, 4
          %s251 = int_to_ptr.vmem [resolvable:$true] %s250
          %253 = dma.hbm_to_vmem [thread:$0]  %s248, 128, %s251, %s236
        $region36: #{tpu_custom_call.1} parent=31 // pred_fallthru
          _
        // Predicated region
        $region37: #{tpu_custom_call.1} parent=31 // pred_check
          %p254 = pneg %p90
        $region38: #{tpu_custom_call.1} parent=31 // pred_check_branch
          %256 = sbr.rel (%p254) target = $region40
        $region39: #{tpu_custom_call.1} parent=31 // pred_region
          %s257 = sand.u32 %s80, 1
          %s258 = scalar_lea.sflag [#allocation9], %s257
          %s259 = sand.u32 %s80, 1
          %s260 = smul.addr %s259, 8
          %s261 = scalar_lea.vmem [#allocation8], %s260
          %s263 = ssub.s32 128, 128
          %264 = vsyncadd %s258, %s263
          %s265 = sadd.s32 %s32, %s31
          %s266 = smul.addr %s265, 128
          %s267 = scalar_lea.hbm %s2, %s266
          %s269 = sshll.u32 %s261, 4
          %s270 = int_to_ptr.vmem [resolvable:$true] %s269
          %272 = dma.hbm_to_vmem [thread:$0]  %s267, 128, %s270, %s258
        $region40: #{tpu_custom_call.1} parent=31 // pred_fallthru
          _
      $region32: #{tpu_custom_call.1} parent=5 // pred_fallthru
        _
      %p273 = scmp.le.s32.totalorder 1, %s24
      %p274 = scmp.lt.s32.totalorder %s24, 3
      %p275 = pnand %p273, %p274
      %p276 = pneg %p275
      // Predicated region
      $region41: #{tpu_custom_call.1} parent=5 // pred_check
        _
      $region42: #{tpu_custom_call.1} parent=5 // pred_check_branch
        %278 = sbr.rel (%p275) target = $region44
      $region43: #{tpu_custom_call.1} parent=5 // pred_region
        %s279 = ssub.s32 %s24, 1
        %s280 = sand.u32 %s55, 1
        %s281 = scalar_lea.sflag [#allocation6], %s280
        %s282 = sand.u32 %s55, 1
        %s283 = smul.addr %s282, 8
        %s284 = scalar_lea.vmem [#allocation5], %s283
        // Predicated region
        $region45: #{tpu_custom_call.1} parent=43 // pred_check
          %p285 = pneg %p68
        $region46: #{tpu_custom_call.1} parent=43 // pred_check_branch
          %287 = sbr.rel (%p285) target = $region48
        $region47: #{tpu_custom_call.1} parent=43 // pred_region
          %288 = dma.done %s281, 128
        $region48: #{tpu_custom_call.1} parent=43 // pred_fallthru
          _
        %s289 = sand.u32 %s83, 1
        %s290 = scalar_lea.sflag [#allocation9], %s289
        %s291 = sand.u32 %s83, 1
        %s292 = smul.addr %s291, 8
        %s293 = scalar_lea.vmem [#allocation8], %s292
        // Predicated region
        $region49: #{tpu_custom_call.1} parent=43 // pred_check
          %p294 = pneg %p96
        $region50: #{tpu_custom_call.1} parent=43 // pred_check_branch
          %296 = sbr.rel (%p294) target = $region52
        $region51: #{tpu_custom_call.1} parent=43 // pred_region
          %297 = dma.done %s290, 128
        $region52: #{tpu_custom_call.1} parent=43 // pred_fallthru
          _
        %s298 = sand.u32 %s55, 1
        %s299 = scalar_lea.sflag [#allocation6], %s298
        %s300 = sand.u32 %s55, 1
        %s301 = smul.addr %s300, 8
        %s302 = scalar_lea.vmem [#allocation5], %s301
        %p303 = pneg %p68
        %p304 = pneg %p65
        %s305 = sand.u32 %s83, 1
        %s306 = scalar_lea.sflag [#allocation9], %s305
        %s307 = sand.u32 %s83, 1
        %s308 = smul.addr %s307, 8
        %s309 = scalar_lea.vmem [#allocation8], %s308
        %p310 = pneg %p96
        %p311 = pneg %p93
        %p312 = pneg %p117
        %p313 = pneg %p114
        %p314 = pneg %p138
        %p315 = pneg %p135
        %p316 = pneg %p159
        %p317 = pneg %p156
        %p318 = pneg %p180
        %p319 = pneg %p177
        %p320 = pneg %p201
        %p321 = pneg %p198
        %s322 = sld [smem:[#allocation4 + %s33]]
        %p323 = scmp.eq.s32.totalorder %s33, 0
        %p324 = scmp.eq.s32.totalorder %s34, 0
        %p325 = pnand %p323, %p324
        %p326 = pneg %p325
        // Predicated region
        $region53: #{tpu_custom_call.1} parent=43 // pred_check
          _
        $region54: #{tpu_custom_call.1} parent=43 // pred_check_branch
          %328 = sbr.rel (%p325) target = $region56
        $region55: #{tpu_custom_call.1} parent=43 // pred_region
          %329 = vst [vmem:[#allocation2] sm:$0xff] 0.0
        $region56: #{tpu_custom_call.1} parent=43 // pred_fallthru
          _
        %v330 = vld [vmem:[%s284] sm:$0xff]
        %v331 = vld [vmem:[%s293] sm:$0xff]
        %v332 = vsub.f32 %v330, %v331
        %v333 = vmul.f32 %v332, %v332
        %v334 = vld [vmem:[#allocation2] sm:$0xff]
        %v335 = vadd.f32 %v333, 0.0
        %v336 = vmul.f32 %v335, 0.001953125
        %v337 = vadd.f32 %v334, %v336
        %338 = vst [vmem:[#allocation2] sm:$0xff] %v337
        %p339 = scmp.eq.s32.totalorder %s33, 1
        %p340 = pnand %p339, %p324
        %p341 = pneg %p340
        // Predicated region
        $region57: #{tpu_custom_call.1} parent=43 // pred_check
          _
        $region58: #{tpu_custom_call.1} parent=43 // pred_check_branch
          %343 = sbr.rel (%p340) target = $region60
        $region59: #{tpu_custom_call.1} parent=43 // pred_region
          %v344 = vld [vmem:[%s3] sm:$0x3]
          %v345 = vld [vmem:[%s4] sm:$0x3]
          %v346 = vsub.f32 %v344, %v345
          %v347 = vmul.f32 %v346, %v346
          %vm348 = vcmask 254976
          %v349 = vsel %vm348, %v347, 0.0
          %350 = vadd.xlane.f32.xlu0 %v349
          %v351 = vpop.xlane.xlu0 %350
          %v352 = vrot.slane %v351, 4
          %v353 = vadd.f32 %v351, %v352
          %v354 = vrot.slane %v353, 2
          %v355 = vadd.f32 %v353, %v354
          %v356 = vrot.slane %v355, 1
          %v357 = vadd.f32 %v355, %v356
          %s358 = vtos %v357
          %v359 = vstv %s358
          %v360 = vld [vmem:[#allocation2] sm:$0xff]
          %361 = vadd.xlane.f32.xlu0 %v360
          %v362 = vpop.xlane.xlu0 %361
          %v363 = vrot.slane %v362, 4
          %v364 = vadd.f32 %v362, %v363
          %v365 = vrot.slane %v364, 2
          %v366 = vadd.f32 %v364, %v365
          %v367 = vrot.slane %v366, 1
          %v368 = vadd.f32 %v366, %v367
          %s369 = vtos %v368
          %v370 = vstv %s369
          %v371 = vmul.f32 %v359, 0.03125
          %v372 = vadd.f32 %v370, %v371
          %v373 = vmul.f32 %v372, 0.25
          %v374 = vld [vmem:[%s5] sm:$0x3]
          %v375 = vld [vmem:[%s6] sm:$0x3]
          %v376 = vsel %vm348, %v374, 0.0
          %v377 = vrot.slane %v376, 4
          %v378 = vadd.f32 %v376, %v377
          %v379 = vrot.slane %v378, 2
          %v380 = vadd.f32 %v378, %v379
          %v381 = vrot.slane %v380, 1
          %v382 = vadd.f32 %v380, %v381
          %v383 = vrcp.pop 2.0
          %v384 = vmul.f32 %v382, %v383
          %v385 = vsub.f32 %v374, %v384
          %v386 = vsel %vm348, %v375, 0.0
          %v387 = vrot.slane %v386, 4
          %v388 = vadd.f32 %v386, %v387
          %v389 = vrot.slane %v388, 2
          %v390 = vadd.f32 %v388, %v389
          %v391 = vrot.slane %v390, 1
          %v392 = vadd.f32 %v390, %v391
          %v393 = vmul.f32 %v392, %v383
          %v394 = vsub.f32 %v375, %v393
          %v395 = vmul.f32 %v385, %v394
          %v396 = vsel %vm348, %v395, 0.0
          %v397 = vrot.slane %v396, 4
          %v398 = vadd.f32 %v396, %v397
          %v399 = vrot.slane %v398, 2
          %v400 = vadd.f32 %v398, %v399
          %v401 = vrot.slane %v400, 1
          %v402 = vadd.f32 %v400, %v401
          %v403 = vmul.f32 %v374, %v374
          %v404 = vsel %vm348, %v403, 0.0
          %v405 = vrot.slane %v404, 4
          %v406 = vadd.f32 %v404, %v405
          %v407 = vrot.slane %v406, 2
          %v408 = vadd.f32 %v406, %v407
          %v409 = vrot.slane %v408, 1
          %v410 = vadd.f32 %v408, %v409
          %v411 = vrsqrt.pop %v410
          %v412 = vmul.f32 %v410, %v411
          %vm413 = vcmp.eq.f32.partialorder %v410, inf
          %v414 = vsel %vm413, %v410, %v412
          %vm415 = vcmp.eq.f32.partialorder %v410, 0.0
          %v416 = vand.u32 %v410, 2147483648
          %v417 = vsel %vm415, %v416, %v414
          %v418 = vmul.f32 %v375, %v375
          %v419 = vsel %vm348, %v418, 0.0
          %v420 = vrot.slane %v419, 4
          %v421 = vadd.f32 %v419, %v420
          %v422 = vrot.slane %v421, 2
          %v423 = vadd.f32 %v421, %v422
          %v424 = vrot.slane %v423, 1
          %v425 = vadd.f32 %v423, %v424
          %v426 = vrsqrt.pop %v425
          %v427 = vmul.f32 %v425, %v426
          %vm428 = vcmp.eq.f32.partialorder %v425, inf
          %v429 = vsel %vm428, %v425, %v427
          %vm430 = vcmp.eq.f32.partialorder %v425, 0.0
          %v431 = vand.u32 %v425, 2147483648
          %v432 = vsel %vm430, %v431, %v429
          %v433 = vmul.f32 %v417, %v432
          %v434 = vadd.f32 %v433, 1e-07
          %v435 = vrcp.pop %v434
          %v436 = vmul.f32 %v402, %v435
          %vm437 = vcmask 253952
          %v438 = vsel %vm437, %v436, 0.0
          %439 = vadd.xlane.f32.xlu0 %v438
          %v440 = vpop.xlane.xlu0 %439
          %v441 = vrot.slane %v440, 4
          %v442 = vadd.f32 %v440, %v441
          %v443 = vrot.slane %v442, 2
          %v444 = vadd.f32 %v442, %v443
          %v445 = vrot.slane %v444, 1
          %v446 = vadd.f32 %v444, %v445
          %s447 = vtos %v446
          %v448 = vstv %s447
          %v449 = vmul.f32 %v448, 0.5
          %v450 = vsub.f32 %v373, %v449
          %vm451 = vcmask 0
          %452 = vst.msk [vmem:[#allocation10] sm:$0x1] %vm451, %v450
        $region60: #{tpu_custom_call.1} parent=43 // pred_fallthru
          _
        // Predicated region
        $region61: #{tpu_custom_call.1} parent=43 // pred_check
          %p453 = pneg %p198
        $region62: #{tpu_custom_call.1} parent=43 // pred_check_branch
          %455 = sbr.rel (%p453) target = $region64
        $region63: #{tpu_custom_call.1} parent=43 // pred_region
          %s457 = ssub.s32 16, 16
          %458 = vsyncadd [#allocation7], %s457
          %s460 = sshll.u32 [#allocation10], 4
          %s461 = int_to_ptr.vmem [resolvable:$true] %s460
          %463 = dma.vmem_to_hbm [thread:$0]  %s461, 16, %s7, [#allocation7]
        $region64: #{tpu_custom_call.1} parent=43 // pred_fallthru
          _
        // Predicated region
        $region65: #{tpu_custom_call.1} parent=43 // pred_check
          %p464 = pneg %p198
        $region66: #{tpu_custom_call.1} parent=43 // pred_check_branch
          %466 = sbr.rel (%p464) target = $region68
        $region67: #{tpu_custom_call.1} parent=43 // pred_region
          %467 = dma.done [#allocation7], 16
        $region68: #{tpu_custom_call.1} parent=43 // pred_fallthru
          _
      $region44: #{tpu_custom_call.1} parent=5 // pred_fallthru
        _
      %p468 = scmp.le.s32.totalorder 2, %s24
      // Predicated region
      $region69: #{tpu_custom_call.1} parent=5 // pred_check
        %p469 = pneg %p468
      $region70: #{tpu_custom_call.1} parent=5 // pred_check_branch
        %471 = sbr.rel (%p469) target = $region72
      $region71: #{tpu_custom_call.1} parent=5 // pred_region
        %s472 = ssub.s32 %s24, 2
      $region72: #{tpu_custom_call.1} parent=5 // pred_fallthru
        _
    $region6: #{tpu_custom_call.1} parent=1 // loop_footer
      %s28 = sadd.s32 1, %s24
    $region7: #{tpu_custom_call.1} parent=1 // loop_footer_branch
      %23 = sbr.rel target = $region3
    $region8: #{tpu_custom_call.1} parent=1 // loop_exit
      _
    %473 = vsyncpa [#allocation6], 1
    %s474 = scalar_lea.sflag [#allocation6], 1
    %475 = vsyncpa %s474, 1
    %476 = vsyncpa [#allocation9], 1
    %s477 = scalar_lea.sflag [#allocation9], 1
    %478 = vsyncpa %s477, 1
    %479 = vsyncpa [#allocation7], 1
    %s480 = scalar_lea.sflag [#allocation7], 1
    %481 = vsyncpa %s480, 1

</llo_original>
